<compile_context>
chip_gen: v7x
topology: tpu7x:2x2x1
jax: 0.10.0
libtpu: 0.0.40
codegen_flags: <defaults>
</compile_context>

<pallas_src>
import jax
import jax.numpy as jnp
from jax.experimental import pallas as pl
from jax.experimental.pallas import tpu as pltpu


def attention_kernel(x_ref, w_ref, o_ref):
    """One grid step handles a block of Bb batch elements.

    x_ref: (Bb, S, H) VMEM tile of the inputs
    w_ref: (1, H)     lane-dense attention weight row (same for every step)
    o_ref: (Bb, H)    per-block output tile
    """
    x = x_ref[...]                                   # (Bb, S, H) f32
    w = w_ref[...]                                   # (1, H)     f32

    # energy[b, s] = sum_h tanh(x[b, s, h]) * w[h]
    # EUP tanh + VPU multiply + XLU lane reduce (no N=1 MXU matvec).
    energy = jnp.sum(jnp.tanh(x) * w, axis=-1, keepdims=True)   # (Bb, S, 1)

    # Numerically-stable softmax over the sequence (sublane) axis.
    m = jnp.max(energy, axis=1, keepdims=True)                  # (Bb, 1, 1)
    p = jnp.exp(energy - m)                                     # (Bb, S, 1)
    denom = jnp.sum(p, axis=1, keepdims=True)                   # (Bb, 1, 1)

    # context[b] = (sum_s x[b, s] * p[b, s]) / denom[b]
    # Single normalization at the end; exact reciprocal keeps 1e-5 parity
    # with the PyTorch reference.
    ctx = jnp.sum(x * p, axis=1)                                # (Bb, H)
    ctx = ctx * pl.reciprocal(denom[:, 0, :])                   # (Bb, 1) bcast
    o_ref[...] = ctx.astype(o_ref.dtype)


def _choose_block_b(B, S, H, itemsize, vmem_budget_bytes=4 * 1024 * 1024):
    """Largest batch block whose double-buffered tiles fit a VMEM budget while
    keeping the block a divisor of B (and sublane-friendly when blocking)."""
    per_b = 2 * (S * H + H) * itemsize          # double-buffered in + out per row
    cap = max(1, vmem_budget_bytes // per_b)
    if B <= cap:
        return B
    best = None
    for d in range(8, min(B, cap) + 1, 8):
        if B % d == 0:
            best = d
    return best if best is not None else B


def attention_layer(inputs, attn_weights):
    """inputs: (B, S, H) f32, attn_weights: (H, 1) f32 -> (B, H) f32."""
    B, S, H = inputs.shape
    w_row = attn_weights.reshape(1, H)           # lane-dense weight row
    block_b = _choose_block_b(B, S, H, inputs.dtype.itemsize)
    grid = (B // block_b,)

    # TODO(synk): for very large S*H (esp. v7x's 64 MiB VMEM) add an S-tiled
    # online-softmax grid axis; not needed at these shapes.
    return pl.pallas_call(
        attention_kernel,
        out_shape=jax.ShapeDtypeStruct((B, H), inputs.dtype),
        grid_spec=pltpu.PrefetchScalarGridSpec(
            num_scalar_prefetch=0,
            grid=grid,
            in_specs=[
                pl.BlockSpec((block_b, S, H), lambda b: (b, 0, 0)),
                pl.BlockSpec((1, H), lambda b: (0, 0)),
            ],
            # Per-block output tile -> each block is written back as it
            # completes and the batch axis can be sharded across TensorCores.
            out_specs=pl.BlockSpec((block_b, H), lambda b: (b, 0)),
        ),
        compiler_params=pltpu.CompilerParams(
            dimension_semantics=("parallel",)),
    )(inputs, w_row)


def reference(inputs, attn_weights):
    energy = jnp.tanh(inputs)
    energy = jnp.matmul(energy, attn_weights)[..., 0]              # (B, S)
    attn = jax.nn.softmax(energy, axis=-1)[..., None]              # (B, S, 1)
    return jnp.sum(inputs * attn, axis=1)                          # (B, H)


if __name__ == "__main__":
    B, S, H = 2, 8, 32

    key = jax.random.PRNGKey(0)
    k_x, k_w = jax.random.split(key)

    # Deterministic inputs.
    x = jax.random.normal(k_x, (B, S, H), dtype=jnp.float32)

    # xavier_uniform_ for a (H, 1) parameter: fan_in = 1, fan_out = H.
    bound = (6.0 / (1.0 + H)) ** 0.5
    w = jax.random.uniform(k_w, (H, 1), dtype=jnp.float32,
                           minval=-bound, maxval=bound)

    out = attention_layer(x, w)
    out = jax.block_until_ready(out)

    ref = reference(x, w)
    assert out.shape == (B, H)
    assert jnp.allclose(out, ref, atol=1e-5, rtol=1e-5), (
        f"max abs err {jnp.max(jnp.abs(out - ref))}")

    print("KERNEL_OK")
</pallas_src>

<mosaic_0001>
module attributes {stable_mosaic.version = 11 : i64} {
  func.func @attention_kernel(%arg0: i32, %arg1: memref<2x8x32xf32, #tpu.memory_space<vmem>>, %arg2: memref<1x32xf32, #tpu.memory_space<vmem>>, %arg3: memref<2x32xf32, #tpu.memory_space<vmem>>) attributes {dimension_semantics = [#tpu.dimension_semantics<parallel>], iteration_bounds = array<i64: 1>, scalar_prefetch = 0 : i64, scratch_operands = 0 : i64, tpu.core_type = #tpu.core_type<tc>, window_params = [{transform_indices = @transform_0, window_bounds = array<i64: 2, 8, 32>}, {pipeline_mode = #tpu.pipeline_mode<synchronous>, transform_indices = @transform_1, window_bounds = array<i64: 1, 32>}, {transform_indices = @transform_2, window_bounds = array<i64: 2, 32>}]} {
    %c0 = arith.constant 0 : index
    %c0_0 = arith.constant 0 : index
    %c0_1 = arith.constant 0 : index
    %0 = vector.load %arg1[%c0, %c0_0, %c0_1] : memref<2x8x32xf32, #tpu.memory_space<vmem>>, vector<2x8x32xf32>
    %c0_2 = arith.constant 0 : index
    %c0_3 = arith.constant 0 : index
    %1 = vector.load %arg2[%c0_2, %c0_3] : memref<1x32xf32, #tpu.memory_space<vmem>>, vector<1x32xf32>
    %2 = math.tanh %0 : vector<2x8x32xf32>
    %3 = vector.shape_cast %1 : vector<1x32xf32> to vector<1x1x32xf32>
    %4 = vector.broadcast %3 : vector<1x1x32xf32> to vector<2x8x32xf32>
    %5 = arith.mulf %2, %4 : vector<2x8x32xf32>
    %cst = arith.constant dense<0.000000e+00> : vector<2x8xf32>
    %6 = vector.multi_reduction <add>, %5, %cst [2] : vector<2x8x32xf32> to vector<2x8xf32>
    %7 = vector.shape_cast %6 : vector<2x8xf32> to vector<2x8x1xf32>
    %cst_4 = arith.constant dense<0xFF800000> : vector<2x1xf32>
    %8 = vector.multi_reduction <maximumf>, %7, %cst_4 [1] : vector<2x8x1xf32> to vector<2x1xf32>
    %9 = vector.shape_cast %8 : vector<2x1xf32> to vector<2x1x1xf32>
    %10 = vector.broadcast %9 : vector<2x1x1xf32> to vector<2x8x1xf32>
    %11 = arith.subf %7, %10 : vector<2x8x1xf32>
    %12 = math.exp %11 : vector<2x8x1xf32>
    %cst_5 = arith.constant dense<0.000000e+00> : vector<2x1xf32>
    %13 = vector.multi_reduction <add>, %12, %cst_5 [1] : vector<2x8x1xf32> to vector<2x1xf32>
    %14 = vector.shape_cast %13 : vector<2x1xf32> to vector<2x1x1xf32>
    %15 = vector.broadcast %12 : vector<2x8x1xf32> to vector<2x8x32xf32>
    %16 = arith.mulf %0, %15 : vector<2x8x32xf32>
    %cst_6 = arith.constant dense<0.000000e+00> : vector<2x32xf32>
    %17 = vector.multi_reduction <add>, %16, %cst_6 [1] : vector<2x8x32xf32> to vector<2x32xf32>
    %18 = vector.shape_cast %14 : vector<2x1x1xf32> to vector<2x1xf32>
    %19 = tpu.reciprocal %18 : vector<2x1xf32> -> vector<2x1xf32>
    %20 = vector.broadcast %19 : vector<2x1xf32> to vector<2x32xf32>
    %21 = arith.mulf %17, %20 : vector<2x32xf32>
    %c0_7 = arith.constant 0 : index
    %c0_8 = arith.constant 0 : index
    %22 = vector.load %arg3[%c0_7, %c0_8] : memref<2x32xf32, #tpu.memory_space<vmem>>, vector<2x32xf32>
    tpu.vector_store %arg3[%c0_7, %c0_8], %21 {strides = array<i32>} : memref<2x32xf32, #tpu.memory_space<vmem>>, vector<2x32xf32>,
    return
  }
  func.func @transform_0(%arg0: i32) -> (i32, i32, i32) {
    %c0_i32 = arith.constant 0 : i32
    %c0_i32_0 = arith.constant 0 : i32
    %c0_i32_1 = arith.constant 0 : i32
    return %arg0, %c0_i32, %c0_i32_0 : i32, i32, i32
  }
  func.func @transform_1(%arg0: i32) -> (i32, i32) {
    %c0_i32 = arith.constant 0 : i32
    %c0_i32_0 = arith.constant 0 : i32
    %c0_i32_1 = arith.constant 0 : i32
    return %c0_i32, %c0_i32_0 : i32, i32
  }
  func.func @transform_2(%arg0: i32) -> (i32, i32) {
    %c0_i32 = arith.constant 0 : i32
    %c0_i32_0 = arith.constant 0 : i32
    return %arg0, %c0_i32 : i32, i32
  }
}

</mosaic_0001>

<llo_original>
// kernel: tpu_custom_call.1
$region0: #{tpu_custom_call.1}
  #allocation0 [shape = 'u32[]', space=smem, size = 0x4, offset = 0x4, fixed_abs, tag = 'smem constant byte address 0x4 - core index']
  #allocation1 [shape = 'u32[144,128]{1,0:T(1,128)}', space=vmem, size = 0x12000, scoped, tag = 'internal scratch']
  %s0 = inlined_call_operand.hbm [shape: f32[2,8,32], index: 0, kind: input, shape index: {}]
  %s1 = inlined_call_operand.vmem [shape: f32[1,32], index: 1, kind: input, shape index: {}]
  %s2 = inlined_call_operand.hbm [shape: f32[2,32], index: 2, kind: output, shape index: {}]
  %s3 = sld [smem:[#allocation0]]
  $region22: #{tpu_custom_call.1} parent=0
    _
  %s5 = ssub.s32 1, %s3
  %s6 = scalar_select 0, %s5, %s3
  $region1: #{tpu_custom_call.1} parent=0
    #allocation2 [shape = 'u8[8192]{0}', space=vmem, size = 0x2000, scoped, tag = 'input window, operand 0, single buffered']
    #allocation3 [shape = 's32[1]{0}', space=sflag, size = 0x4, scoped, tag = 'scoped memory for tpu_custom_call.1']
    #allocation4 [shape = 's32[1]{0}', space=sflag, size = 0x4, scoped, tag = 'scoped memory for tpu_custom_call.1']
    #allocation5 [shape = 'u8[1024]{0}', space=vmem, size = 0x400, scoped, tag = 'output window, operand 0, single buffered']
    %7 = vsyncpa [#allocation3], 0
    %8 = vsyncpa [#allocation4], 0
    // Predicated region
    $region2: #{tpu_custom_call.1} parent=1 // pred_check
      _
    $region3: #{tpu_custom_call.1} parent=1 // pred_check_branch
      %10 = sbr.rel (0) target = $region5
    $region4: #{tpu_custom_call.1} parent=1 // pred_region
      %s12 = ssub.s32 256, 256
      %13 = vsyncadd [#allocation3], %s12
      %s14 = sshll.u32 [#allocation2], 4
      %s15 = int_to_ptr.vmem [resolvable:$true] %s14
      %20 = dma.hbm_to_vmem [thread:$0]  %s0, 256, %s15, [#allocation3], 128, 128, 8
    $region5: #{tpu_custom_call.1} parent=1 // pred_fallthru
      _
    // Predicated region
    $region6: #{tpu_custom_call.1} parent=1 // pred_check
      _
    $region7: #{tpu_custom_call.1} parent=1 // pred_check_branch
      %22 = sbr.rel (0) target = $region9
    $region8: #{tpu_custom_call.1} parent=1 // pred_region
      _
    $region9: #{tpu_custom_call.1} parent=1 // pred_fallthru
      _
    // Predicated region
    $region10: #{tpu_custom_call.1} parent=1 // pred_check
      _
    $region11: #{tpu_custom_call.1} parent=1 // pred_check_branch
      %24 = sbr.rel (0) target = $region13
    $region12: #{tpu_custom_call.1} parent=1 // pred_region
      %25 = dma.done [#allocation3], 256
    $region13: #{tpu_custom_call.1} parent=1 // pred_fallthru
      _
    %v26 = vld [vmem:[#allocation2] sm:$0xff]
    %v27 = vld [vmem:[#allocation2 + $0x8] sm:$0xff]
    %v28 = vld [vmem:[%s1] sm:$0x1]
    %v29 = vtanh.pop %v26
    %v30 = vtanh.pop %v27
    %v32 = vlaneseq
    %v33 = vshrl.u32 %v32, 7
    %v34 = vsub.s32 0, %v33
    %v35 = vrot.slane %v28, %v34
    %v37 = vmul.f32 %v29, %v35
    %v38 = vmul.f32 %v30, %v35
    %vm39 = vcmask 261120
    %v40 = vsel %vm39, %v37, 0.0
    %41 = vadd.xlane.f32.xlu0 %v40
    %v42 = vpop.xlane.xlu0 %41
    %v43 = vsel %vm39, %v38, 0.0
    %44 = vadd.xlane.f32.xlu0 %v43
    %v45 = vpop.xlane.xlu0 %44
    %v46 = vrot.slane %v42, 4
    %v47 = vmax.f32 %v42, %v46
    %v48 = vrot.slane %v47, 2
    %v49 = vmax.f32 %v47, %v48
    %v50 = vrot.slane %v49, 1
    %v51 = vmax.f32 %v49, %v50
    %v52 = vrot.slane %v45, 4
    %v53 = vmax.f32 %v45, %v52
    %v54 = vrot.slane %v53, 2
    %v55 = vmax.f32 %v53, %v54
    %v56 = vrot.slane %v55, 1
    %v57 = vmax.f32 %v55, %v56
    %v58 = vsub.f32 %v42, %v51
    %v59 = vsub.f32 %v45, %v57
    %v60 = vmul.f32 %v58, 1.442695
    %v61 = vpow.pop %v60
    %v62 = vmul.f32 %v59, 1.442695
    %v63 = vpow.pop %v62
    %v64 = vrot.slane %v61, 4
    %v65 = vadd.f32 %v61, %v64
    %v66 = vrot.slane %v65, 2
    %v67 = vadd.f32 %v65, %v66
    %v68 = vrot.slane %v67, 1
    %v69 = vadd.f32 %v67, %v68
    %v70 = vrot.slane %v63, 4
    %v71 = vadd.f32 %v63, %v70
    %v72 = vrot.slane %v71, 2
    %v73 = vadd.f32 %v71, %v72
    %v74 = vrot.slane %v73, 1
    %v75 = vadd.f32 %v73, %v74
    %v76 = vmul.f32 %v26, %v61
    %v77 = vmul.f32 %v27, %v63
    %v78 = vsel %vm39, %v76, 0.0
    %v79 = vrot.slane %v78, 4
    %v80 = vadd.f32 %v78, %v79
    %v81 = vrot.slane %v80, 2
    %v82 = vadd.f32 %v80, %v81
    %v83 = vrot.slane %v82, 1
    %v84 = vadd.f32 %v82, %v83
    %v85 = vsel %vm39, %v77, 0.0
    %v86 = vrot.slane %v85, 4
    %v87 = vadd.f32 %v85, %v86
    %v88 = vrot.slane %v87, 2
    %v89 = vadd.f32 %v87, %v88
    %v90 = vrot.slane %v89, 1
    %v91 = vadd.f32 %v89, %v90
    %v92 = vrcp.pop %v69
    %v93 = vrcp.pop %v75
    %v94 = vmul.f32 %v84, %v92
    %v95 = vmul.f32 %v91, %v93
    %vm98 = vcmask 1041409
    %v99 = vsel %vm98, %v95, %v94
    %vm101 = vcmask 254976
    %102 = vst.msk [vmem:[#allocation5] sm:$0x3] %vm101, %v99
    // Predicated region
    $region14: #{tpu_custom_call.1} parent=1 // pred_check
      _
    $region15: #{tpu_custom_call.1} parent=1 // pred_check_branch
      %104 = sbr.rel (0) target = $region17
    $region16: #{tpu_custom_call.1} parent=1 // pred_region
      %s106 = ssub.s32 32, 32
      %107 = vsyncadd [#allocation4], %s106
      %s109 = sshll.u32 [#allocation5], 4
      %s110 = int_to_ptr.vmem [resolvable:$true] %s109
      %112 = dma.vmem_to_hbm [thread:$0]  %s110, 32, %s2, [#allocation4]
    $region17: #{tpu_custom_call.1} parent=1 // pred_fallthru
      _
    // Predicated region
    $region18: #{tpu_custom_call.1} parent=1 // pred_check
      _
    $region19: #{tpu_custom_call.1} parent=1 // pred_check_branch
      %114 = sbr.rel (0) target = $region21
    $region20: #{tpu_custom_call.1} parent=1 // pred_region
      %115 = dma.done [#allocation4], 32
    $region21: #{tpu_custom_call.1} parent=1 // pred_fallthru
      _
    %116 = vsyncpa [#allocation3], 1
    %117 = vsyncpa [#allocation4], 1

</llo_original>
